<compile_context>
chip_gen: v7x
topology: tpu7x:2x2x1
jax: 0.10.0
libtpu: 0.0.40
codegen_flags: <defaults>
</compile_context>

<pallas_src>
import functools
import math

import jax
import jax.numpy as jnp
from jax import lax
from jax.experimental import pallas as pl
from jax.experimental.pallas import tpu as pltpu

_P_X1 = 0.05                                     # dropout prob on x1 (static, from the module)
_KEEP_THRESH_16 = int(round(_P_X1 * (1 << 16)))  # drop iff low-16 hash bits < 3277
_INV_KEEP = 1.0 / (1.0 - _P_X1)                  # hoisted dropout scale
_U2_SCALE = 1.0 / (1 << 16)                      # hoisted uniform scale
_GOLDEN = 0x9E3779B9
_STREAM = 0x2545F491
_C_LANES = 512                                   # lane-dense flattened row width (multiple of 128)
_TM_MAX = 1024                                   # (1024, 512) f32 tile = 2 MiB (4 MiB double-buffered)


def _mix32(x):
    """32-bit avalanche mixer (lowbias32 finalizer) on uint32 data — VPU only."""
    x = x ^ (x >> 16)
    x = x * jnp.uint32(0x7FEB352D)
    x = x ^ (x >> 15)
    x = x * jnp.uint32(0x846CA68B)
    x = x ^ (x >> 16)
    return x


def _model_kernel(seed_ref, x1_ref, o_ref, acc_x1_ref, acc_u2_ref, *, tm, steps, n_elems):
    c = pl.program_id(0)   # core-split axis ("parallel")
    s = pl.program_id(1)   # streaming tile axis ("arbitrary", accumulated)

    @pl.when(s == 0)
    def _init():
        acc_x1_ref[...] = jnp.zeros_like(acc_x1_ref)
        acc_u2_ref[...] = jnp.zeros_like(acc_u2_ref)

    tile_idx = c * steps + s
    base = tile_idx * (tm * _C_LANES)            # flat element offset of this tile (scalar)
    tile_end = base + tm * _C_LANES

    # ---- per-element flat counter (one stream; disjoint bit fields for the two uses) ----
    row = lax.broadcasted_iota(jnp.int32, (tm, _C_LANES), 0)
    col = lax.broadcasted_iota(jnp.int32, (tm, _C_LANES), 1)
    local = row * _C_LANES + col                 # tile-local flat index

    seed_u = seed_ref[0].astype(jnp.uint32) * jnp.uint32(_GOLDEN)
    off = base.astype(jnp.uint32) + seed_u + jnp.uint32(_STREAM)
    h = _mix32(local.astype(jnp.uint32) + off)   # single hash per element

    # dropout(x1, p=0.05): integer threshold on the low 16 bits (no float convert, no scale)
    keep = (h & jnp.uint32(0xFFFF)).astype(jnp.int32) >= jnp.int32(_KEEP_THRESH_16)
    # x2 = rand_like: raw top-16 bits as float (2^-16 scale applied once in finalize)
    u2 = (h >> 16).astype(jnp.int32).astype(jnp.float32)

    # ---- reduce each tile contribution to a vreg-row-sized (8, 512) slab (pure VALU) ----
    kept = jnp.where(keep, x1_ref[...], jnp.float32(0.0))   # pad rows are zero -> no valid mask
    acc_x1_ref[...] += jnp.sum(kept.reshape(tm // 8, 8, _C_LANES), axis=0)

    @pl.when(tile_end <= n_elems)                # fast path: tile fully valid, no mask
    def _full():
        acc_u2_ref[...] += jnp.sum(u2.reshape(tm // 8, 8, _C_LANES), axis=0)

    @pl.when(tile_end > n_elems)                 # tail path: tile contains padding
    def _tail():
        rem = jnp.int32(n_elems) - base
        u2m = jnp.where(local < rem, u2, jnp.float32(0.0))
        acc_u2_ref[...] += jnp.sum(u2m.reshape(tm // 8, 8, _C_LANES), axis=0)

    # ---- finalize: one cross-lane reduce per core; hoisted scales applied once ----
    @pl.when(s == steps - 1)
    def _finalize():
        o_ref[0, 0] = (jnp.sum(acc_x1_ref[...]) * jnp.float32(_INV_KEEP)
                       + jnp.sum(acc_u2_ref[...]) * jnp.float32(_U2_SCALE))


def _round_up(x, m):
    return -(-x // m) * m


def _num_tensorcores():
    """2 on megacore parts (v4 / v5p / v7x), else 1 (v5e / v6e expose one TC per device)."""
    try:
        kind = jax.devices()[0].device_kind.lower()
    except Exception:
        return 1
    if any(t in kind for t in ("v7", "7x", "v5p", "v4")):
        return 2
    return 1


def model_forward(x1, x2, x3, seed=0):
    """JAX/Pallas equivalent of Model.forward. Returns a float32 scalar."""
    assert x2.shape == x1.shape, "x2 must match x1 so rand_like(x2) broadcasts with x1"
    assert x3.shape == x1.shape[1:], "x3 must broadcast against x1/x2 over the batch axis"

    p_x3 = float(x2.shape[1] < 8)   # static, exactly as in the PyTorch module (0.0 or 1.0)
    batch = int(x1.shape[0])
    n = int(math.prod(x1.shape))

    # ---- tile geometry: flat lane-dense (tm, 512) tiles, split across the TensorCores ----
    ncores = _num_tensorcores()
    rows = -(-n // _C_LANES)
    rows8 = _round_up(max(rows, 1), 8)
    per_core = _round_up(-(-rows8 // ncores), 8)
    tm = min(_TM_MAX, per_core)                  # always a multiple of 8
    steps = -(-per_core // tm)
    rows_final = ncores * steps * tm

    x1_flat = x1.astype(jnp.float32).reshape(-1)
    pad = rows_final * _C_LANES - n
    if pad:
        x1_flat = jnp.pad(x1_flat, (0, pad))     # zero pad -> contributes nothing to the x1 sum
    x1f = x1_flat.reshape(rows_final, _C_LANES)

    seed_arr = jnp.array([seed], dtype=jnp.int32)
    kernel = functools.partial(_model_kernel, tm=tm, steps=steps, n_elems=n)

    partials = pl.pallas_call(
        kernel,
        grid=(ncores, steps),
        out_shape=jax.ShapeDtypeStruct((ncores, 1), jnp.float32),
        in_specs=[
            pl.BlockSpec(memory_space=pltpu.MemorySpace.SMEM),            # seed scalar
            pl.BlockSpec((tm, _C_LANES), lambda c, s: (c * steps + s, 0)),  # x1 tiles (pipelined)
        ],
        out_specs=pl.BlockSpec((1, 1), lambda c, s: (c, 0),
                               memory_space=pltpu.MemorySpace.SMEM),
        scratch_shapes=[pltpu.VMEM((8, _C_LANES), jnp.float32),   # acc: kept-x1 partial sums
                        pltpu.VMEM((8, _C_LANES), jnp.float32)],  # acc: raw-uniform partial sums
        compiler_params=pltpu.CompilerParams(
            dimension_semantics=("parallel", "arbitrary")),
    )(seed_arr, x1f)

    total = jnp.sum(partials)                    # combine the per-core partial scalars

    # x3: dropout(x3, p) with static p; it broadcasts over the batch axis, so its
    # contribution is batch * sum(x3) when p == 0 and exactly 0 when p == 1.
    if p_x3 < 1.0:
        total = total + jnp.float32(batch) * jnp.sum(x3.astype(jnp.float32))
    return total


if __name__ == "__main__":
    key = jax.random.PRNGKey(0)
    k1, k2, k3 = jax.random.split(key, 3)

    # Small broadcast-compatible shapes (B=2, R=16, C=128); x2.shape[1]=16 >= 8 -> p_x3 = 0.0
    x1 = jax.random.normal(k1, (2, 16, 128), dtype=jnp.float32)
    x2 = jax.random.normal(k2, (2, 16, 128), dtype=jnp.float32)  # values unused (rand_like)
    x3 = jax.random.normal(k3, (16, 128), dtype=jnp.float32)

    out = model_forward(x1, x2, x3, seed=42)
    out = jax.block_until_ready(out)

    # Sanity: E[out] = sum(x1) + 0.5*numel(x2) + B*sum(x3); stochastic std ~25, use a wide band.
    expected = float(jnp.sum(x1) + 0.5 * x2.size + x1.shape[0] * jnp.sum(x3))
    assert out.shape == () and bool(jnp.isfinite(out)), "non-finite or non-scalar output"
    assert abs(float(out) - expected) < 500.0, (float(out), expected)
    print("KERNEL_OK")
</pallas_src>

<mosaic_0001>
module attributes {stable_mosaic.version = 11 : i64} {
  func.func @_model_kernel(%arg0: i32, %arg1: i32, %arg2: memref<1xi32, #tpu.memory_space<smem>>, %arg3: memref<8x512xf32, #tpu.memory_space<vmem>>, %arg4: memref<1x1xf32, #tpu.memory_space<smem>>, %arg5: memref<8x512xf32, #tpu.memory_space<vmem>>, %arg6: memref<8x512xf32, #tpu.memory_space<vmem>>) attributes {dimension_semantics = [#tpu.dimension_semantics<parallel>, #tpu.dimension_semantics<arbitrary>], iteration_bounds = array<i64: 1, 1>, scalar_prefetch = 0 : i64, scratch_operands = 2 : i64, tpu.core_type = #tpu.core_type<tc>, window_params = [{transform_indices = @transform_0, window_bounds = array<i64: 1>}, {transform_indices = @transform_1, window_bounds = array<i64: 8, 512>}, {transform_indices = @transform_2, window_bounds = array<i64: 1, 1>}]} {
    %c0_i32 = arith.constant 0 : i32
    %0 = arith.cmpi eq, %arg1, %c0_i32 : i32
    %1 = arith.extui %0 : i1 to i32
    %c0_i32_0 = arith.constant 0 : i32
    %2 = arith.cmpi ne, %1, %c0_i32_0 : i32
    scf.if %2 {
      %cst_17 = arith.constant 0.000000e+00 : f32
      %55 = vector.broadcast %cst_17 : f32 to vector<8x512xf32>
      %c0_18 = arith.constant 0 : index
      %c0_19 = arith.constant 0 : index
      %56 = vector.load %arg5[%c0_18, %c0_19] : memref<8x512xf32, #tpu.memory_space<vmem>>, vector<8x512xf32>
      tpu.vector_store %arg5[%c0_18, %c0_19], %55 {strides = array<i32>} : memref<8x512xf32, #tpu.memory_space<vmem>>, vector<8x512xf32>,
      %cst_20 = arith.constant 0.000000e+00 : f32
      %57 = vector.broadcast %cst_20 : f32 to vector<8x512xf32>
      %c0_21 = arith.constant 0 : index
      %c0_22 = arith.constant 0 : index
      %58 = vector.load %arg6[%c0_21, %c0_22] : memref<8x512xf32, #tpu.memory_space<vmem>>, vector<8x512xf32>
      tpu.vector_store %arg6[%c0_21, %c0_22], %57 {strides = array<i32>} : memref<8x512xf32, #tpu.memory_space<vmem>>, vector<8x512xf32>,
    } else {
    }
    %c1_i32 = arith.constant 1 : i32
    %3 = arith.muli %arg0, %c1_i32 : i32
    %4 = arith.addi %3, %arg1 : i32
    %c4096_i32 = arith.constant 4096 : i32
    %5 = arith.muli %4, %c4096_i32 : i32
    %c4096_i32_1 = arith.constant 4096 : i32
    %6 = arith.addi %5, %c4096_i32_1 : i32
    %7 = tpu.iota {dimensions = array<i32: 0>} : vector<8x512xi32>
    %8 = tpu.iota {dimensions = array<i32: 1>} : vector<8x512xi32>
    %c512_i32 = arith.constant 512 : i32
    %9 = vector.broadcast %c512_i32 : i32 to vector<8x512xi32>
    %10 = arith.muli %7, %9 : vector<8x512xi32>
    %11 = arith.addi %10, %8 : vector<8x512xi32>
    %c0 = arith.constant 0 : index
    %12 = memref.load %arg2[%c0] : memref<1xi32, #tpu.memory_space<smem>>
    %c-1640531527_i32 = arith.constant -1640531527 : i32
    %13 = arith.muli %12, %c-1640531527_i32 : i32
    %14 = arith.addi %5, %13 : i32
    %c625341585_i32 = arith.constant 625341585 : i32
    %15 = arith.addi %14, %c625341585_i32 : i32
    %16 = vector.broadcast %15 : i32 to vector<8x512xi32>
    %17 = arith.addi %11, %16 : vector<8x512xi32>
    %c16_i32 = arith.constant 16 : i32
    %18 = vector.broadcast %c16_i32 : i32 to vector<8x512xi32>
    %19 = arith.shrui %17, %18 : vector<8x512xi32>
    %20 = arith.xori %17, %19 : vector<8x512xi32>
    %c2146121005_i32 = arith.constant 2146121005 : i32
    %21 = vector.broadcast %c2146121005_i32 : i32 to vector<8x512xi32>
    %22 = arith.muli %20, %21 : vector<8x512xi32>
    %c15_i32 = arith.constant 15 : i32
    %23 = vector.broadcast %c15_i32 : i32 to vector<8x512xi32>
    %24 = arith.shrui %22, %23 : vector<8x512xi32>
    %25 = arith.xori %22, %24 : vector<8x512xi32>
    %c-2073254261_i32 = arith.constant -2073254261 : i32
    %26 = vector.broadcast %c-2073254261_i32 : i32 to vector<8x512xi32>
    %27 = arith.muli %25, %26 : vector<8x512xi32>
    %c16_i32_2 = arith.constant 16 : i32
    %28 = vector.broadcast %c16_i32_2 : i32 to vector<8x512xi32>
    %29 = arith.shrui %27, %28 : vector<8x512xi32>
    %30 = arith.xori %27, %29 : vector<8x512xi32>
    %c65535_i32 = arith.constant 65535 : i32
    %31 = vector.broadcast %c65535_i32 : i32 to vector<8x512xi32>
    %32 = arith.andi %30, %31 : vector<8x512xi32>
    %c3277_i32 = arith.constant 3277 : i32
    %33 = vector.broadcast %c3277_i32 : i32 to vector<8x512xi32>
    %34 = arith.cmpi sge, %32, %33 : vector<8x512xi32>
    %c16_i32_3 = arith.constant 16 : i32
    %35 = vector.broadcast %c16_i32_3 : i32 to vector<8x512xi32>
    %36 = arith.shrui %30, %35 : vector<8x512xi32>
    %37 = arith.sitofp %36 : vector<8x512xi32> to vector<8x512xf32>
    %c0_4 = arith.constant 0 : index
    %c0_5 = arith.constant 0 : index
    %38 = vector.load %arg3[%c0_4, %c0_5] : memref<8x512xf32, #tpu.memory_space<vmem>>, vector<8x512xf32>
    %cst = arith.constant 0.000000e+00 : f32
    %39 = vector.broadcast %cst : f32 to vector<8x512xf32>
    %40 = arith.select %34, %38, %39 : vector<8x512xi1>, vector<8x512xf32>
    %c0_6 = arith.constant 0 : index
    %c0_7 = arith.constant 0 : index
    %41 = vector.load %arg5[%c0_6, %c0_7] : memref<8x512xf32, #tpu.memory_space<vmem>>, vector<8x512xf32>
    %42 = vector.shape_cast %40 : vector<8x512xf32> to vector<1x8x512xf32>
    %cst_8 = arith.constant dense<0.000000e+00> : vector<8x512xf32>
    %43 = vector.multi_reduction <add>, %42, %cst_8 [0] : vector<1x8x512xf32> to vector<8x512xf32>
    %44 = arith.addf %41, %43 : vector<8x512xf32>
    %c0_9 = arith.constant 0 : index
    %c0_10 = arith.constant 0 : index
    %45 = vector.load %arg5[%c0_9, %c0_10] : memref<8x512xf32, #tpu.memory_space<vmem>>, vector<8x512xf32>
    tpu.vector_store %arg5[%c0_9, %c0_10], %44 {strides = array<i32>} : memref<8x512xf32, #tpu.memory_space<vmem>>, vector<8x512xf32>,
    %c4096_i32_11 = arith.constant 4096 : i32
    %46 = arith.cmpi sle, %6, %c4096_i32_11 : i32
    %47 = arith.extui %46 : i1 to i32
    %c0_i32_12 = arith.constant 0 : i32
    %48 = arith.cmpi ne, %47, %c0_i32_12 : i32
    scf.if %48 {
      %c0_17 = arith.constant 0 : index
      %c0_18 = arith.constant 0 : index
      %55 = vector.load %arg6[%c0_17, %c0_18] : memref<8x512xf32, #tpu.memory_space<vmem>>, vector<8x512xf32>
      %56 = vector.shape_cast %37 : vector<8x512xf32> to vector<1x8x512xf32>
      %cst_19 = arith.constant dense<0.000000e+00> : vector<8x512xf32>
      %57 = vector.multi_reduction <add>, %56, %cst_19 [0] : vector<1x8x512xf32> to vector<8x512xf32>
      %58 = arith.addf %55, %57 : vector<8x512xf32>
      %c0_20 = arith.constant 0 : index
      %c0_21 = arith.constant 0 : index
      %59 = vector.load %arg6[%c0_20, %c0_21] : memref<8x512xf32, #tpu.memory_space<vmem>>, vector<8x512xf32>
      tpu.vector_store %arg6[%c0_20, %c0_21], %58 {strides = array<i32>} : memref<8x512xf32, #tpu.memory_space<vmem>>, vector<8x512xf32>,
    } else {
    }
    %c4096_i32_13 = arith.constant 4096 : i32
    %49 = arith.cmpi sgt, %6, %c4096_i32_13 : i32
    %50 = arith.extui %49 : i1 to i32
    %c0_i32_14 = arith.constant 0 : i32
    %51 = arith.cmpi ne, %50, %c0_i32_14 : i32
    scf.if %51 {
      %c4096_i32_17 = arith.constant 4096 : i32
      %55 = arith.subi %c4096_i32_17, %5 : i32
      %56 = vector.broadcast %55 : i32 to vector<8x512xi32>
      %57 = arith.cmpi slt, %11, %56 : vector<8x512xi32>
      %cst_18 = arith.constant 0.000000e+00 : f32
      %58 = vector.broadcast %cst_18 : f32 to vector<8x512xf32>
      %59 = arith.select %57, %37, %58 : vector<8x512xi1>, vector<8x512xf32>
      %c0_19 = arith.constant 0 : index
      %c0_20 = arith.constant 0 : index
      %60 = vector.load %arg6[%c0_19, %c0_20] : memref<8x512xf32, #tpu.memory_space<vmem>>, vector<8x512xf32>
      %61 = vector.shape_cast %59 : vector<8x512xf32> to vector<1x8x512xf32>
      %cst_21 = arith.constant dense<0.000000e+00> : vector<8x512xf32>
      %62 = vector.multi_reduction <add>, %61, %cst_21 [0] : vector<1x8x512xf32> to vector<8x512xf32>
      %63 = arith.addf %60, %62 : vector<8x512xf32>
      %c0_22 = arith.constant 0 : index
      %c0_23 = arith.constant 0 : index
      %64 = vector.load %arg6[%c0_22, %c0_23] : memref<8x512xf32, #tpu.memory_space<vmem>>, vector<8x512xf32>
      tpu.vector_store %arg6[%c0_22, %c0_23], %63 {strides = array<i32>} : memref<8x512xf32, #tpu.memory_space<vmem>>, vector<8x512xf32>,
    } else {
    }
    %c0_i32_15 = arith.constant 0 : i32
    %52 = arith.cmpi eq, %arg1, %c0_i32_15 : i32
    %53 = arith.extui %52 : i1 to i32
    %c0_i32_16 = arith.constant 0 : i32
    %54 = arith.cmpi ne, %53, %c0_i32_16 : i32
    scf.if %54 {
      %c0_17 = arith.constant 0 : index
      %c0_18 = arith.constant 0 : index
      %55 = vector.load %arg5[%c0_17, %c0_18] : memref<8x512xf32, #tpu.memory_space<vmem>>, vector<8x512xf32>
      %56 = vector.shape_cast %55 : vector<8x512xf32> to vector<1x8x512xf32>
      %cst_19 = arith.constant dense<0.000000e+00> : vector<1xf32>
      %57 = vector.multi_reduction <add>, %56, %cst_19 [1, 2] : vector<1x8x512xf32> to vector<1xf32>
      %58 = vector.shape_cast %57 : vector<1xf32> to vector<1x1x1xf32>
      %59 = vector.extract %58[0, 0, 0] : f32 from vector<1x1x1xf32>
      %cst_20 = arith.constant 1.05263162 : f32
      %60 = arith.mulf %59, %cst_20 : f32
      %c0_21 = arith.constant 0 : index
      %c0_22 = arith.constant 0 : index
      %61 = vector.load %arg6[%c0_21, %c0_22] : memref<8x512xf32, #tpu.memory_space<vmem>>, vector<8x512xf32>
      %62 = vector.shape_cast %61 : vector<8x512xf32> to vector<1x8x512xf32>
      %cst_23 = arith.constant dense<0.000000e+00> : vector<1xf32>
      %63 = vector.multi_reduction <add>, %62, %cst_23 [1, 2] : vector<1x8x512xf32> to vector<1xf32>
      %64 = vector.shape_cast %63 : vector<1xf32> to vector<1x1x1xf32>
      %65 = vector.extract %64[0, 0, 0] : f32 from vector<1x1x1xf32>
      %cst_24 = arith.constant 1.52587891E-5 : f32
      %66 = arith.mulf %65, %cst_24 : f32
      %67 = arith.addf %60, %66 : f32
      %c0_25 = arith.constant 0 : index
      %c0_26 = arith.constant 0 : index
      %68 = memref.load %arg4[%c0_25, %c0_26] : memref<1x1xf32, #tpu.memory_space<smem>>
      memref.store %67, %arg4[%c0_25, %c0_26] : memref<1x1xf32, #tpu.memory_space<smem>>
    } else {
    }
    return
  }
  func.func @transform_0(%arg0: i32, %arg1: i32) -> i32 {
    %c0_i32 = arith.constant 0 : i32
    %c0_i32_0 = arith.constant 0 : i32
    return %c0_i32 : i32
  }
  func.func @transform_1(%arg0: i32, %arg1: i32) -> (i32, i32) {
    %c1_i32 = arith.constant 1 : i32
    %0 = arith.muli %arg0, %c1_i32 : i32
    %1 = arith.addi %0, %arg1 : i32
    %c0_i32 = arith.constant 0 : i32
    %c0_i32_0 = arith.constant 0 : i32
    return %1, %c0_i32 : i32, i32
  }
  func.func @transform_2(%arg0: i32, %arg1: i32) -> (i32, i32) {
    %c0_i32 = arith.constant 0 : i32
    %c0_i32_0 = arith.constant 0 : i32
    return %arg0, %c0_i32 : i32, i32
  }
}

</mosaic_0001>

<llo_original>
// kernel: tpu_custom_call.1
$region0: #{tpu_custom_call.1}
  #allocation0 [shape = 'u32[]', space=smem, size = 0x4, offset = 0x4, fixed_abs, tag = 'smem constant byte address 0x4 - core index']
  #allocation1 [shape = 'u32[144,128]{1,0:T(1,128)}', space=vmem, size = 0x12000, scoped, tag = 'internal scratch']
  #allocation2 [shape = 'f32[8,512]{1,0:T(8,128)}', space=vmem, size = 0x4000, scoped, tag = 'scratch operand']
  #allocation3 [shape = 'f32[8,512]{1,0:T(8,128)}', space=vmem, size = 0x4000, scoped, tag = 'scratch operand']
  #allocation4 [shape = 's32[1]{0:T(128)S(6)}', space=smem, size = 0x200, scoped, tag = 'scoped memory for tpu_custom_call.1']
  %s0 = inlined_call_operand.<no memory space> [shape: s32[1], index: 0, kind: input, shape index: {}]
  %s1 = inlined_call_operand.hbm [shape: f32[8,512], index: 1, kind: input, shape index: {}]
  %s2 = inlined_call_operand.hbm [shape: f32[1,1], index: 2, kind: output, shape index: {}]
  %s3 = sld [smem:[#allocation0]]
  $region38: #{tpu_custom_call.1} parent=0
    _
  %s5 = ssub.s32 1, %s3
  %s6 = scalar_select 0, %s5, %s3
  %7 = sst [smem:[#allocation4]] %s0
  $region1: #{tpu_custom_call.1} parent=0
    #allocation5 [shape = 'u8[16384]{0}', space=vmem, size = 0x4000, scoped, tag = 'input window, operand 1, single buffered']
    #allocation6 [shape = 's32[1]{0}', space=sflag, size = 0x4, scoped, tag = 'scoped memory for tpu_custom_call.1']
    #allocation7 [shape = 's32[1]{0}', space=sflag, size = 0x4, scoped, tag = 'scoped memory for tpu_custom_call.1']
    #allocation8 [shape = 'u8[512]{0}', space=smem, size = 0x200, scoped, tag = 'output window, operand 0, single buffered']
    %8 = vsyncpa [#allocation6], 0
    %9 = vsyncpa [#allocation7], 0
    // Predicated region
    $region2: #{tpu_custom_call.1} parent=1 // pred_check
      _
    $region3: #{tpu_custom_call.1} parent=1 // pred_check_branch
      %11 = sbr.rel (0) target = $region5
    $region4: #{tpu_custom_call.1} parent=1 // pred_region
      _
    $region5: #{tpu_custom_call.1} parent=1 // pred_fallthru
      _
    // Predicated region
    $region6: #{tpu_custom_call.1} parent=1 // pred_check
      _
    $region7: #{tpu_custom_call.1} parent=1 // pred_check_branch
      %13 = sbr.rel (0) target = $region9
    $region8: #{tpu_custom_call.1} parent=1 // pred_region
      %s14 = sadd.s32 0, 0
      %s16 = ssub.s32 512, 512
      %17 = vsyncadd [#allocation6], %s16
      %s18 = smul.addr %s14, 4
      %s19 = smul.addr %s18, 128
      %s20 = scalar_lea.hbm %s1, %s19
      %s22 = sshll.u32 [#allocation5], 4
      %s23 = int_to_ptr.vmem [resolvable:$true] %s22
      %25 = dma.hbm_to_vmem [thread:$0]  %s20, 512, %s23, [#allocation6]
    $region9: #{tpu_custom_call.1} parent=1 // pred_fallthru
      _
    // Predicated region
    $region10: #{tpu_custom_call.1} parent=1 // pred_check
      _
    $region11: #{tpu_custom_call.1} parent=1 // pred_check_branch
      %27 = sbr.rel (0) target = $region13
    $region12: #{tpu_custom_call.1} parent=1 // pred_region
      %28 = dma.done [#allocation6], 512
    $region13: #{tpu_custom_call.1} parent=1 // pred_fallthru
      _
    %s29 = sadd.s32 0, 0
    %p30 = scmp.eq.s32.totalorder 0, 0
    // Predicated region
    $region14: #{tpu_custom_call.1} parent=1 // pred_check
      %p31 = pneg %p30
    $region15: #{tpu_custom_call.1} parent=1 // pred_check_branch
      %33 = sbr.rel (%p31) target = $region17
    $region16: #{tpu_custom_call.1} parent=1 // pred_region
      %34 = vst [vmem:[#allocation2] sm:$0xff] 0.0
      %35 = vst [vmem:[#allocation2 + $0x8] sm:$0xff] 0.0
      %36 = vst [vmem:[#allocation2 + $0x10] sm:$0xff] 0.0
      %37 = vst [vmem:[#allocation2 + $0x18] sm:$0xff] 0.0
      %38 = vst [vmem:[#allocation3] sm:$0xff] 0.0
      %39 = vst [vmem:[#allocation3 + $0x8] sm:$0xff] 0.0
      %40 = vst [vmem:[#allocation3 + $0x10] sm:$0xff] 0.0
      %41 = vst [vmem:[#allocation3 + $0x18] sm:$0xff] 0.0
    $region17: #{tpu_custom_call.1} parent=1 // pred_fallthru
      _
    %s42 = sadd.s32 0, 0
    %s43 = smul.u32 %s42, 4096
    %s44 = sadd.s32 %s43, 4096
    %v45 = vlaneseq
    %v46 = vshrl.u32 %v45, 7
    %v47 = vlaneseq
    %v48 = vand.u32 %v47, 127
    %v49 = vadd.s32 %v48, 128
    %v50 = vadd.s32 %v48, 256
    %v51 = vadd.s32 %v48, 384
    %v52 = vmul.u32 %v46, 512
    %v53 = vadd.s32 %v52, %v48
    %v54 = vadd.s32 %v52, %v49
    %v55 = vadd.s32 %v52, %v50
    %v56 = vadd.s32 %v52, %v51
    %s57 = sld [smem:[#allocation4]]
    %s58 = smul.u32 %s57, 2654435769
    %s59 = sadd.s32 %s43, %s58
    %s60 = sadd.s32 %s59, 625341585
    %v61 = vstv %s60
    %v62 = vadd.s32 %v53, %v61
    %v63 = vadd.s32 %v54, %v61
    %v64 = vadd.s32 %v55, %v61
    %v65 = vadd.s32 %v56, %v61
    %v66 = vshrl.u32 %v62, 16
    %v67 = vshrl.u32 %v63, 16
    %v68 = vshrl.u32 %v64, 16
    %v69 = vshrl.u32 %v65, 16
    %v70 = vxor.u32 %v62, %v66
    %v71 = vxor.u32 %v63, %v67
    %v72 = vxor.u32 %v64, %v68
    %v73 = vxor.u32 %v65, %v69
    %v74 = vmul.u32 %v70, 2146121005
    %v75 = vmul.u32 %v71, 2146121005
    %v76 = vmul.u32 %v72, 2146121005
    %v77 = vmul.u32 %v73, 2146121005
    %v78 = vshrl.u32 %v74, 15
    %v79 = vshrl.u32 %v75, 15
    %v80 = vshrl.u32 %v76, 15
    %v81 = vshrl.u32 %v77, 15
    %v82 = vxor.u32 %v74, %v78
    %v83 = vxor.u32 %v75, %v79
    %v84 = vxor.u32 %v76, %v80
    %v85 = vxor.u32 %v77, %v81
    %v86 = vmul.u32 %v82, 2221713035
    %v87 = vmul.u32 %v83, 2221713035
    %v88 = vmul.u32 %v84, 2221713035
    %v89 = vmul.u32 %v85, 2221713035
    %v90 = vshrl.u32 %v86, 16
    %v91 = vshrl.u32 %v87, 16
    %v92 = vshrl.u32 %v88, 16
    %v93 = vshrl.u32 %v89, 16
    %v94 = vxor.u32 %v86, %v90
    %v95 = vxor.u32 %v87, %v91
    %v96 = vxor.u32 %v88, %v92
    %v97 = vxor.u32 %v89, %v93
    %v98 = vand.u32 %v94, 65535
    %v99 = vand.u32 %v95, 65535
    %v100 = vand.u32 %v96, 65535
    %v101 = vand.u32 %v97, 65535
    %vm102 = vcmp.ge.s32.totalorder %v98, 3277
    %vm103 = vcmp.ge.s32.totalorder %v99, 3277
    %vm104 = vcmp.ge.s32.totalorder %v100, 3277
    %vm105 = vcmp.ge.s32.totalorder %v101, 3277
    %v106 = vshrl.u32 %v94, 16
    %v107 = vshrl.u32 %v95, 16
    %v108 = vshrl.u32 %v96, 16
    %v109 = vshrl.u32 %v97, 16
    %v110 = vcvt.s32.f32 %v106
    %v111 = vcvt.s32.f32 %v107
    %v112 = vcvt.s32.f32 %v108
    %v113 = vcvt.s32.f32 %v109
    %v114 = vld [vmem:[#allocation5] sm:$0xff]
    %v115 = vld [vmem:[#allocation5 + $0x8] sm:$0xff]
    %v116 = vld [vmem:[#allocation5 + $0x10] sm:$0xff]
    %v117 = vld [vmem:[#allocation5 + $0x18] sm:$0xff]
    %v118 = vsel %vm102, %v114, 0.0
    %v119 = vsel %vm103, %v115, 0.0
    %v120 = vsel %vm104, %v116, 0.0
    %v121 = vsel %vm105, %v117, 0.0
    %v122 = vld [vmem:[#allocation2] sm:$0xff]
    %v123 = vld [vmem:[#allocation2 + $0x8] sm:$0xff]
    %v124 = vld [vmem:[#allocation2 + $0x10] sm:$0xff]
    %v125 = vld [vmem:[#allocation2 + $0x18] sm:$0xff]
    %v126 = vadd.f32 %v118, 0.0
    %v127 = vadd.f32 %v119, 0.0
    %v128 = vadd.f32 %v120, 0.0
    %v129 = vadd.f32 %v121, 0.0
    %v130 = vadd.f32 %v122, %v126
    %v131 = vadd.f32 %v123, %v127
    %v132 = vadd.f32 %v124, %v128
    %v133 = vadd.f32 %v125, %v129
    %134 = vst [vmem:[#allocation2] sm:$0xff] %v130
    %135 = vst [vmem:[#allocation2 + $0x8] sm:$0xff] %v131
    %136 = vst [vmem:[#allocation2 + $0x10] sm:$0xff] %v132
    %137 = vst [vmem:[#allocation2 + $0x18] sm:$0xff] %v133
    %p138 = scmp.le.s32.totalorder %s44, 4096
    // Predicated region
    $region18: #{tpu_custom_call.1} parent=1 // pred_check
      %p139 = pneg %p138
    $region19: #{tpu_custom_call.1} parent=1 // pred_check_branch
      %141 = sbr.rel (%p139) target = $region21
    $region20: #{tpu_custom_call.1} parent=1 // pred_region
      %v142 = vld [vmem:[#allocation3] sm:$0xff]
      %v143 = vld [vmem:[#allocation3 + $0x8] sm:$0xff]
      %v144 = vld [vmem:[#allocation3 + $0x10] sm:$0xff]
      %v145 = vld [vmem:[#allocation3 + $0x18] sm:$0xff]
      %v146 = vadd.f32 %v110, 0.0
      %v147 = vadd.f32 %v111, 0.0
      %v148 = vadd.f32 %v112, 0.0
      %v149 = vadd.f32 %v113, 0.0
      %v150 = vadd.f32 %v142, %v146
      %v151 = vadd.f32 %v143, %v147
      %v152 = vadd.f32 %v144, %v148
      %v153 = vadd.f32 %v145, %v149
      %154 = vst [vmem:[#allocation3] sm:$0xff] %v150
      %155 = vst [vmem:[#allocation3 + $0x8] sm:$0xff] %v151
      %156 = vst [vmem:[#allocation3 + $0x10] sm:$0xff] %v152
      %157 = vst [vmem:[#allocation3 + $0x18] sm:$0xff] %v153
    $region21: #{tpu_custom_call.1} parent=1 // pred_fallthru
      _
    %p158 = scmp.gt.s32.totalorder %s44, 4096
    // Predicated region
    $region22: #{tpu_custom_call.1} parent=1 // pred_check
      %p159 = pneg %p158
    $region23: #{tpu_custom_call.1} parent=1 // pred_check_branch
      %161 = sbr.rel (%p159) target = $region25
    $region24: #{tpu_custom_call.1} parent=1 // pred_region
      %s162 = ssub.s32 4096, %s43
      %v163 = vstv %s162
      %vm164 = vcmp.lt.s32.totalorder %v53, %v163
      %vm165 = vcmp.lt.s32.totalorder %v54, %v163
      %vm166 = vcmp.lt.s32.totalorder %v55, %v163
      %vm167 = vcmp.lt.s32.totalorder %v56, %v163
      %v168 = vsel %vm164, %v110, 0.0
      %v169 = vsel %vm165, %v111, 0.0
      %v170 = vsel %vm166, %v112, 0.0
      %v171 = vsel %vm167, %v113, 0.0
      %v172 = vld [vmem:[#allocation3] sm:$0xff]
      %v173 = vld [vmem:[#allocation3 + $0x8] sm:$0xff]
      %v174 = vld [vmem:[#allocation3 + $0x10] sm:$0xff]
      %v175 = vld [vmem:[#allocation3 + $0x18] sm:$0xff]
      %v176 = vadd.f32 %v168, 0.0
      %v177 = vadd.f32 %v169, 0.0
      %v178 = vadd.f32 %v170, 0.0
      %v179 = vadd.f32 %v171, 0.0
      %v180 = vadd.f32 %v172, %v176
      %v181 = vadd.f32 %v173, %v177
      %v182 = vadd.f32 %v174, %v178
      %v183 = vadd.f32 %v175, %v179
      %184 = vst [vmem:[#allocation3] sm:$0xff] %v180
      %185 = vst [vmem:[#allocation3 + $0x8] sm:$0xff] %v181
      %186 = vst [vmem:[#allocation3 + $0x10] sm:$0xff] %v182
      %187 = vst [vmem:[#allocation3 + $0x18] sm:$0xff] %v183
    $region25: #{tpu_custom_call.1} parent=1 // pred_fallthru
      _
    // Predicated region
    $region26: #{tpu_custom_call.1} parent=1 // pred_check
      %p188 = pneg %p30
    $region27: #{tpu_custom_call.1} parent=1 // pred_check_branch
      %190 = sbr.rel (%p188) target = $region29
    $region28: #{tpu_custom_call.1} parent=1 // pred_region
      %v191 = vld [vmem:[#allocation2] sm:$0xff]
      %v192 = vld [vmem:[#allocation2 + $0x8] sm:$0xff]
      %v193 = vld [vmem:[#allocation2 + $0x10] sm:$0xff]
      %v194 = vld [vmem:[#allocation2 + $0x18] sm:$0xff]
      %v195 = vadd.f32 %v191, %v192
      %v196 = vadd.f32 %v195, %v193
      %v197 = vadd.f32 %v196, %v194
      %198 = vadd.xlane.f32.xlu0 %v197
      %v199 = vpop.xlane.xlu0 %198
      %v200 = vrot.slane %v199, 4
      %v201 = vadd.f32 %v199, %v200
      %v202 = vrot.slane %v201, 2
      %v203 = vadd.f32 %v201, %v202
      %v204 = vrot.slane %v203, 1
      %v205 = vadd.f32 %v203, %v204
      %s206 = vtos %v205
      %s207 = smul.f32 %s206, 1.0526316
      %v208 = vld [vmem:[#allocation3] sm:$0xff]
      %v209 = vld [vmem:[#allocation3 + $0x8] sm:$0xff]
      %v210 = vld [vmem:[#allocation3 + $0x10] sm:$0xff]
      %v211 = vld [vmem:[#allocation3 + $0x18] sm:$0xff]
      %v212 = vadd.f32 %v208, %v209
      %v213 = vadd.f32 %v212, %v210
      %v214 = vadd.f32 %v213, %v211
      %215 = vadd.xlane.f32.xlu0 %v214
      %v216 = vpop.xlane.xlu0 %215
      %v217 = vrot.slane %v216, 4
      %v218 = vadd.f32 %v216, %v217
      %v219 = vrot.slane %v218, 2
      %v220 = vadd.f32 %v218, %v219
      %v221 = vrot.slane %v220, 1
      %v222 = vadd.f32 %v220, %v221
      %s223 = vtos %v222
      %s224 = smul.f32 %s223, 1.5258789e-05
      %s225 = sadd.f32 %s207, %s224
      %s226 = scalar_lea.smem [#allocation8], 0
      %227 = sst [smem:[%s226]] %s225
    $region29: #{tpu_custom_call.1} parent=1 // pred_fallthru
      _
    // Predicated region
    $region30: #{tpu_custom_call.1} parent=1 // pred_check
      _
    $region31: #{tpu_custom_call.1} parent=1 // pred_check_branch
      %229 = sbr.rel (0) target = $region33
    $region32: #{tpu_custom_call.1} parent=1 // pred_region
      %s231 = ssub.s32 16, 16
      %232 = vsyncadd [#allocation7], %s231
      %235 = dma.smem_to_hbm [#allocation8], 16, %s2, [#allocation7]
    $region33: #{tpu_custom_call.1} parent=1 // pred_fallthru
      _
    // Predicated region
    $region34: #{tpu_custom_call.1} parent=1 // pred_check
      _
    $region35: #{tpu_custom_call.1} parent=1 // pred_check_branch
      %237 = sbr.rel (0) target = $region37
    $region36: #{tpu_custom_call.1} parent=1 // pred_region
      %238 = dma.done [#allocation7], 16
    $region37: #{tpu_custom_call.1} parent=1 // pred_fallthru
      _
    %239 = sfence
    %240 = vsyncpa [#allocation6], 1
    %241 = vsyncpa [#allocation7], 1

</llo_original>
